<compile_context>
chip_gen: v7x
topology: tpu7x:2x2x1
jax: 0.10.0
libtpu: 0.0.40
codegen_flags: <defaults>
</compile_context>

<pallas_src>
import jax
import jax.numpy as jnp
from jax.experimental import pallas as pl
from jax.experimental.pallas import tpu as pltpu

IN_FEATURES = 10
OUT_FEATURES = 1


def _linear_kernel(x_ref, w_ref, b_ref, o_ref):
    # x_ref: (tb, 10) VMEM   w_ref: (1, 10) VMEM   b_ref: (1, 1) SMEM
    # o_ref: (tb, 1)  VMEM
    x = x_ref[...].astype(jnp.float32)              # (tb, 10)  VPU
    w = w_ref[...].astype(jnp.float32)              # (1, 10) -> sublane broadcast
    b = b_ref[0, 0]                                 # scalar from SMEM
    # VPU multiply + cross-lane (XLU) reduction over the 10 features; no MXU.
    y = jnp.sum(x * w, axis=1, keepdims=True) + b   # (tb, 1) f32
    o_ref[...] = y.astype(o_ref.dtype)


def _round_up(v, m):
    return ((v + m - 1) // m) * m


def simple_model_forward(x, weight, bias, *, block_batch=8192,
                         xla_batch_threshold=1024, force_pallas=False):
    """x: (B, 10), weight: (1, 10), bias: (1,) -> (B, 1)."""
    batch = x.shape[0]
    out_dtype = jnp.promote_types(x.dtype, weight.dtype)  # f32 for f32 params

    # Small batches: the whole op is a few KB; fixed pallas_call overhead
    # dominates, so let XLA fuse it (review item).
    if batch <= xla_batch_threshold and not force_pallas:
        y = jnp.dot(x.astype(out_dtype), weight.astype(out_dtype).T)
        return (y + bias.astype(out_dtype)).reshape(batch, OUT_FEATURES)

    assert block_batch % 8 == 0, "block_batch must be a multiple of 8"

    # Block-size selection.
    if batch <= block_batch:
        tb = batch                           # single full-extent block
    else:
        tb = block_batch                     # multiple of 8 -> sublane aligned
        steps = pl.cdiv(batch, tb)
        if steps < 8:                        # v7x: keep both TCs busy ...
            cand = _round_up(pl.cdiv(batch, 8), 8)
            if cand >= 2048:                 # ... without tiny, overhead-bound blocks
                tb = cand
    grid = (pl.cdiv(batch, tb),)

    w2 = weight.reshape(OUT_FEATURES, IN_FEATURES)        # (1, 10), no upcast
    b2 = bias.astype(jnp.float32).reshape(1, 1)           # (1, 1) -> SMEM scalar

    out = pl.pallas_call(
        _linear_kernel,
        out_shape=jax.ShapeDtypeStruct((batch, OUT_FEATURES), out_dtype),
        grid=grid,
        in_specs=[
            pl.BlockSpec((tb, IN_FEATURES), lambda i: (i, 0)),
            pl.BlockSpec((OUT_FEATURES, IN_FEATURES), lambda i: (0, 0)),
            pl.BlockSpec(memory_space=pltpu.MemorySpace.SMEM),  # bias: scalar path
        ],
        out_specs=pl.BlockSpec((tb, OUT_FEATURES), lambda i: (i, 0)),
        compiler_params=pltpu.CompilerParams(
            dimension_semantics=("parallel",),  # megacore sharding on v7x
            vmem_limit_bytes=32 << 20,          # lane-padded tiles; v5e default is 16 MiB
        ),
    )(x, w2, b2)
    return out


if __name__ == "__main__":
    key = jax.random.PRNGKey(0)
    kx, kw, kb, kx2, kx3 = jax.random.split(key, 5)

    # Deterministic params (mimic torch.nn.Linear uniform(-1/sqrt(10), 1/sqrt(10))).
    bound = 1.0 / jnp.sqrt(jnp.float32(IN_FEATURES))
    weight = jax.random.uniform(kw, (OUT_FEATURES, IN_FEATURES),
                                dtype=jnp.float32, minval=-bound, maxval=bound)
    bias = jax.random.uniform(kb, (OUT_FEATURES,),
                              dtype=jnp.float32, minval=-bound, maxval=bound)

    # 1) Tiny batch: exercises the small-batch XLA dispatch path.
    x = jax.random.normal(kx, (8, IN_FEATURES), dtype=jnp.float32)
    out = jax.block_until_ready(simple_model_forward(x, weight, bias))
    ref = x @ weight.T + bias
    assert out.shape == (8, OUT_FEATURES)
    assert jnp.allclose(out, ref, atol=1e-5, rtol=1e-5)

    # 2) Pallas path: multi-block grid with a partial last block (200 rows, tb=128).
    x2 = jax.random.normal(kx2, (200, IN_FEATURES), dtype=jnp.float32)
    out2 = jax.block_until_ready(
        simple_model_forward(x2, weight, bias, block_batch=128, force_pallas=True))
    ref2 = x2 @ weight.T + bias
    assert out2.shape == (200, OUT_FEATURES)
    assert jnp.allclose(out2, ref2, atol=1e-5, rtol=1e-5)

    # 3) Pallas path: single full-extent block, bf16 input streamed without upcast.
    x3 = jax.random.normal(kx3, (64, IN_FEATURES), dtype=jnp.float32).astype(jnp.bfloat16)
    out3 = jax.block_until_ready(
        simple_model_forward(x3, weight, bias, force_pallas=True))
    ref3 = x3.astype(jnp.float32) @ weight.T + bias
    assert out3.shape == (64, OUT_FEATURES)
    assert out3.dtype == jnp.float32
    assert jnp.allclose(out3, ref3, atol=2e-2, rtol=2e-2)

    print("KERNEL_OK")
</pallas_src>

<mosaic_0001>
module attributes {stable_mosaic.version = 11 : i64} {
  func.func @_linear_kernel(%arg0: i32, %arg1: memref<128x10xf32, #tpu.memory_space<vmem>>, %arg2: memref<1x10xf32, #tpu.memory_space<vmem>>, %arg3: memref<1x1xf32, #tpu.memory_space<smem>>, %arg4: memref<128x1xf32, #tpu.memory_space<vmem>>) attributes {dimension_semantics = [#tpu.dimension_semantics<parallel>], iteration_bounds = array<i64: 2>, scalar_prefetch = 0 : i64, scratch_operands = 0 : i64, tpu.core_type = #tpu.core_type<tc>, window_params = [{transform_indices = @transform_0, window_bounds = array<i64: 128, 10>}, {pipeline_mode = #tpu.pipeline_mode<synchronous>, transform_indices = @transform_1, window_bounds = array<i64: 1, 10>}, {transform_indices = @transform_2, window_bounds = array<i64: 1, 1>}, {transform_indices = @transform_3, window_bounds = array<i64: 128, 1>}]} {
    %c0 = arith.constant 0 : index
    %c0_0 = arith.constant 0 : index
    %0 = vector.load %arg1[%c0, %c0_0] : memref<128x10xf32, #tpu.memory_space<vmem>>, vector<128x10xf32>
    %c0_1 = arith.constant 0 : index
    %c0_2 = arith.constant 0 : index
    %1 = vector.load %arg2[%c0_1, %c0_2] : memref<1x10xf32, #tpu.memory_space<vmem>>, vector<1x10xf32>
    %c0_3 = arith.constant 0 : index
    %c0_4 = arith.constant 0 : index
    %2 = memref.load %arg3[%c0_3, %c0_4] : memref<1x1xf32, #tpu.memory_space<smem>>
    %3 = vector.broadcast %1 : vector<1x10xf32> to vector<128x10xf32>
    %4 = arith.mulf %0, %3 : vector<128x10xf32>
    %cst = arith.constant dense<0.000000e+00> : vector<128xf32>
    %5 = vector.multi_reduction <add>, %4, %cst [1] : vector<128x10xf32> to vector<128xf32>
    %6 = vector.shape_cast %5 : vector<128xf32> to vector<128x1xf32>
    %7 = vector.broadcast %2 : f32 to vector<128x1xf32>
    %8 = arith.addf %6, %7 : vector<128x1xf32>
    %c0_5 = arith.constant 0 : index
    %c0_6 = arith.constant 0 : index
    %9 = vector.load %arg4[%c0_5, %c0_6] : memref<128x1xf32, #tpu.memory_space<vmem>>, vector<128x1xf32>
    tpu.vector_store %arg4[%c0_5, %c0_6], %8 {strides = array<i32>} : memref<128x1xf32, #tpu.memory_space<vmem>>, vector<128x1xf32>,
    return
  }
  func.func @transform_0(%arg0: i32) -> (i32, i32) {
    %c0_i32 = arith.constant 0 : i32
    %c0_i32_0 = arith.constant 0 : i32
    return %arg0, %c0_i32 : i32, i32
  }
  func.func @transform_1(%arg0: i32) -> (i32, i32) {
    %c0_i32 = arith.constant 0 : i32
    %c0_i32_0 = arith.constant 0 : i32
    %c0_i32_1 = arith.constant 0 : i32
    return %c0_i32, %c0_i32_0 : i32, i32
  }
  func.func @transform_2(%arg0: i32) -> (i32, i32) {
    %c0_i32 = arith.constant 0 : i32
    %c0_i32_0 = arith.constant 0 : i32
    %c0_i32_1 = arith.constant 0 : i32
    return %c0_i32, %c0_i32_0 : i32, i32
  }
  func.func @transform_3(%arg0: i32) -> (i32, i32) {
    %c0_i32 = arith.constant 0 : i32
    %c0_i32_0 = arith.constant 0 : i32
    return %arg0, %c0_i32 : i32, i32
  }
}

</mosaic_0001>

<llo_original>
// kernel: tpu_custom_call.1
$region0: #{tpu_custom_call.1}
  #allocation0 [shape = 'u32[]', space=smem, size = 0x4, offset = 0x4, fixed_abs, tag = 'smem constant byte address 0x4 - core index']
  #allocation1 [shape = 'u32[144,128]{1,0:T(1,128)}', space=vmem, size = 0x12000, scoped, tag = 'internal scratch']
  #allocation2 [shape = 'f32[1,1]{1,0:T(1,128)S(6)}', space=smem, size = 0x200, scoped, tag = 'scoped memory for tpu_custom_call.1']
  %s0 = inlined_call_operand.vmem [shape: f32[200,10], index: 0, kind: input, shape index: {}]
  %s1 = inlined_call_operand.vmem [shape: f32[1,10], index: 1, kind: input, shape index: {}]
  %s2 = inlined_call_operand.<no memory space> [shape: f32[1,1], index: 2, kind: input, shape index: {}]
  %s3 = inlined_call_operand.vmem [shape: f32[200,1], index: 3, kind: output, shape index: {}]
  %s4 = sld [smem:[#allocation0]]
  $region93: #{tpu_custom_call.1} parent=0
    _
  %s6 = ssub.s32 1, %s4
  %s7 = scalar_select 0, %s6, %s4
  %8 = sst [smem:[#allocation2]] %s2
  $region1: #{tpu_custom_call.1} parent=0
    #allocation3 [shape = 'u8[131072]{0}', space=vmem, size = 0x20000, scoped, tag = 'output window, operand 0']
    loop: start=0, step=1, limit=4
    $region2: #{tpu_custom_call.1} parent=1 // loop_pre_header
      _
    $region3: #{tpu_custom_call.1} parent=1 // loop_header
      %s10 = sphi 0, %s14
      %p11 = scmp.ge.s32.totalorder %s10, 4
      %s20 = sphi 0, %s22
      %s23 = sphi 0, %s20
      %s24 = sphi 0, %s23
      %s40 = sphi 0, %s24
      %s44 = sphi 0, %s44
      %s46 = sphi 0, %s44
      %s47 = sphi 0, %s46
      %s61 = sphi 0, %s47
      %s65 = sphi 0, %s65
      %s67 = sphi 0, %s65
      %s68 = sphi 0, %s67
      %s82 = sphi 0, %s68
      %s88 = sphi 0, %s90
      %s91 = sphi 0, %s88
      %s92 = sphi 0, %s91
      %s108 = sphi 0, %s92
    $region4: #{tpu_custom_call.1} parent=1 // loop_header_branch
      %13 = sbr.rel (%p11) target = $region8
    $region5: #{tpu_custom_call.1} parent=1 // loop_body
      %s15 = ssub.s32 %s10, 1
      %s16 = ssub.s32 %s10, 2
      %s17 = sadd.s32 %s10, 1
      %s18 = ssub.s32 %s10, %s17
      %p19 = scmp.eq.s32.totalorder %s18, 0
      %s21 = sadd.s32 %s20, 1
      %s22 = scalar_select %p19, %s20, %s21
      %p25 = pneg %p19
      %p26 = scmp.eq.s32.totalorder %s10, 1
      %p27 = por %p25, %p26
      %p28 = scmp.ne.s32.totalorder %s20, %s23
      %p29 = scmp.eq.s32.totalorder %s10, 0
      %p30 = por %p28, %p29
      %p31 = scmp.ne.s32.totalorder %s20, %s23
      %p32 = scmp.eq.s32.totalorder %s15, 1
      %p33 = por %p31, %p32
      %p34 = scmp.ne.s32.totalorder %s23, %s24
      %p35 = scmp.eq.s32.totalorder %s15, 0
      %p36 = por %p34, %p35
      %p37 = scmp.ne.s32.totalorder %s23, %s24
      %p38 = scmp.eq.s32.totalorder %s16, 1
      %p39 = por %p37, %p38
      %p41 = scmp.ne.s32.totalorder %s24, %s40
      %p42 = scmp.eq.s32.totalorder %s16, 0
      %p43 = por %p41, %p42
      %s45 = sadd.s32 %s44, 1
      %p48 = scmp.eq.s32.totalorder %s10, 1
      %p49 = scmp.ne.s32.totalorder %s44, %s46
      %p50 = scmp.eq.s32.totalorder %s10, 0
      %p51 = por %p49, %p50
      %p52 = scmp.ne.s32.totalorder %s44, %s46
      %p53 = scmp.eq.s32.totalorder %s15, 1
      %p54 = por %p52, %p53
      %p55 = scmp.ne.s32.totalorder %s46, %s47
      %p56 = scmp.eq.s32.totalorder %s15, 0
      %p57 = por %p55, %p56
      %p58 = scmp.ne.s32.totalorder %s46, %s47
      %p59 = scmp.eq.s32.totalorder %s16, 1
      %p60 = por %p58, %p59
      %p62 = scmp.ne.s32.totalorder %s47, %s61
      %p63 = scmp.eq.s32.totalorder %s16, 0
      %p64 = por %p62, %p63
      %s66 = sadd.s32 %s65, 1
      %p69 = scmp.eq.s32.totalorder %s10, 1
      %p70 = scmp.ne.s32.totalorder %s65, %s67
      %p71 = scmp.eq.s32.totalorder %s10, 0
      %p72 = por %p70, %p71
      %p73 = scmp.ne.s32.totalorder %s65, %s67
      %p74 = scmp.eq.s32.totalorder %s15, 1
      %p75 = por %p73, %p74
      %p76 = scmp.ne.s32.totalorder %s67, %s68
      %p77 = scmp.eq.s32.totalorder %s15, 0
      %p78 = por %p76, %p77
      %p79 = scmp.ne.s32.totalorder %s67, %s68
      %p80 = scmp.eq.s32.totalorder %s16, 1
      %p81 = por %p79, %p80
      %p83 = scmp.ne.s32.totalorder %s68, %s82
      %p84 = scmp.eq.s32.totalorder %s16, 0
      %p85 = por %p83, %p84
      %s86 = ssub.s32 %s10, %s17
      %p87 = scmp.eq.s32.totalorder %s86, 0
      %s89 = sadd.s32 %s88, 1
      %s90 = scalar_select %p87, %s88, %s89
      %p93 = pneg %p87
      %p94 = scmp.eq.s32.totalorder %s10, 1
      %p95 = por %p93, %p94
      %p96 = scmp.ne.s32.totalorder %s88, %s91
      %p97 = scmp.eq.s32.totalorder %s10, 0
      %p98 = por %p96, %p97
      %p99 = scmp.ne.s32.totalorder %s88, %s91
      %p100 = scmp.eq.s32.totalorder %s15, 1
      %p101 = por %p99, %p100
      %p102 = scmp.ne.s32.totalorder %s91, %s92
      %p103 = scmp.eq.s32.totalorder %s15, 0
      %p104 = por %p102, %p103
      %p105 = scmp.ne.s32.totalorder %s91, %s92
      %p106 = scmp.eq.s32.totalorder %s16, 1
      %p107 = por %p105, %p106
      %p109 = scmp.ne.s32.totalorder %s92, %s108
      %p110 = scmp.eq.s32.totalorder %s16, 0
      %p111 = por %p109, %p110
      %p112 = scmp.le.s32.totalorder 1, %s10
      %p113 = scmp.lt.s32.totalorder %s10, 3
      %p114 = pnand %p112, %p113
      %p115 = pneg %p114
      // Predicated region
      $region9: #{tpu_custom_call.1} parent=5 // pred_check
        _
      $region10: #{tpu_custom_call.1} parent=5 // pred_check_branch
        %117 = sbr.rel (%p114) target = $region12
      $region11: #{tpu_custom_call.1} parent=5 // pred_region
        %s118 = ssub.s32 %s10, 1
        // Predicated region
        $region13: #{tpu_custom_call.1} parent=11 // pred_check
          %p119 = pneg %p57
        $region14: #{tpu_custom_call.1} parent=11 // pred_check_branch
          %121 = sbr.rel (%p119) target = $region16
        $region15: #{tpu_custom_call.1} parent=11 // pred_region
          _
        $region16: #{tpu_custom_call.1} parent=11 // pred_fallthru
          _
        // Predicated region
        $region17: #{tpu_custom_call.1} parent=11 // pred_check
          %p122 = pneg %p78
        $region18: #{tpu_custom_call.1} parent=11 // pred_check_branch
          %124 = sbr.rel (%p122) target = $region20
        $region19: #{tpu_custom_call.1} parent=11 // pred_region
          _
        $region20: #{tpu_custom_call.1} parent=11 // pred_fallthru
          _
      $region12: #{tpu_custom_call.1} parent=5 // pred_fallthru
        _
      %p125 = scmp.lt.s32.totalorder %s10, 2
      // Predicated region
      $region21: #{tpu_custom_call.1} parent=5 // pred_check
        %p126 = pneg %p125
      $region22: #{tpu_custom_call.1} parent=5 // pred_check_branch
        %128 = sbr.rel (%p126) target = $region24
      $region23: #{tpu_custom_call.1} parent=5 // pred_region
        // Predicated region
        $region25: #{tpu_custom_call.1} parent=23 // pred_check
          %p129 = pneg %p30
        $region26: #{tpu_custom_call.1} parent=23 // pred_check_branch
          %131 = sbr.rel (%p129) target = $region28
        $region27: #{tpu_custom_call.1} parent=23 // pred_region
          %s132 = smul.u32 16, %s10
          %s133 = ssub.s32 25, %s132
          %p134 = scmp.lt.s32.totalorder %s133, 16
          %s135 = scalar_select %p134, %s133, 16
          %s136 = smul.u32 128, %s135
          %p137 = scmp.lt.s32.totalorder %s132, 24
          %s138 = scalar_select %p137, %s132, 24
          %s139 = smul.addr %s138, 8
          %s140 = scalar_lea.vmem %s0, %s139
          %s141 = smul.u32 16, %s10
          %s142 = ssub.s32 25, %s141
          %p143 = scmp.lt.s32.totalorder %s142, 16
          %s144 = scalar_select %p143, %s142, 16
          %s145 = smul.u32 128, %s144
        $region28: #{tpu_custom_call.1} parent=23 // pred_fallthru
          _
      $region24: #{tpu_custom_call.1} parent=5 // pred_fallthru
        _
      %p146 = scmp.le.s32.totalorder 1, %s10
      %p147 = scmp.lt.s32.totalorder %s10, 3
      %p148 = pnand %p146, %p147
      %p149 = pneg %p148
      // Predicated region
      $region29: #{tpu_custom_call.1} parent=5 // pred_check
        _
      $region30: #{tpu_custom_call.1} parent=5 // pred_check_branch
        %151 = sbr.rel (%p148) target = $region32
      $region31: #{tpu_custom_call.1} parent=5 // pred_region
        %s152 = ssub.s32 %s10, 1
        %s153 = smul.u32 16, %s15
        %s154 = ssub.s32 25, %s153
        %p155 = scmp.lt.s32.totalorder %s154, 16
        %s156 = scalar_select %p155, %s154, 16
        %s157 = smul.u32 128, %s156
        %p158 = scmp.lt.s32.totalorder %s153, 24
        %s159 = scalar_select %p158, %s153, 24
        %s160 = smul.addr %s159, 8
        %s161 = scalar_lea.vmem %s0, %s160
        %p162 = pneg %p36
        %p163 = pneg %p33
        %p164 = pneg %p57
        %p165 = pneg %p54
        %p166 = pneg %p78
        %p167 = pneg %p75
        %p168 = pneg %p104
        %p169 = pneg %p101
        %s170 = sand.u32 %s91, 1
        %s171 = sand.u32 %s91, 1
        %s172 = smul.addr %s171, 128
        %s173 = scalar_lea.vmem [#allocation3], %s172
        %s174 = smul.u32 16, %s15
        %s175 = ssub.s32 25, %s174
        %p176 = scmp.lt.s32.totalorder %s175, 16
        %s177 = scalar_select %p176, %s175, 16
        %s178 = smul.u32 128, %s177
        %p179 = scmp.lt.s32.totalorder %s174, 24
        %s180 = scalar_select %p179, %s174, 24
        %s181 = smul.addr %s180, 8
        %s182 = scalar_lea.vmem %s0, %s181
        %s183 = smul.u32 16, %s15
        %s184 = ssub.s32 25, %s183
        %p185 = scmp.lt.s32.totalorder %s184, 16
        %s186 = scalar_select %p185, %s184, 16
        %s187 = smul.u32 128, %s186
        %s188 = smul.u32 16, %s15
        %s189 = ssub.s32 25, %s188
        %p190 = scmp.lt.s32.totalorder %s189, 16
        %s191 = scalar_select %p190, %s189, 16
        %s192 = smul.u32 128, %s191
        %v193 = vld [vmem:[%s182] sm:$0xff]
        %v194 = vld [vmem:[%s182 + $0x8] sm:$0xff]
        %v195 = vld [vmem:[%s182 + $0x10] sm:$0xff]
        %v196 = vld [vmem:[%s182 + $0x18] sm:$0xff]
        %v197 = vld [vmem:[%s182 + $0x20] sm:$0xff]
        %v198 = vld [vmem:[%s182 + $0x28] sm:$0xff]
        %v199 = vld [vmem:[%s182 + $0x30] sm:$0xff]
        %v200 = vld [vmem:[%s182 + $0x38] sm:$0xff]
        %v201 = vld [vmem:[%s182 + $0x40] sm:$0xff]
        %v202 = vld [vmem:[%s182 + $0x48] sm:$0xff]
        %v203 = vld [vmem:[%s182 + $0x50] sm:$0xff]
        %v204 = vld [vmem:[%s182 + $0x58] sm:$0xff]
        %v205 = vld [vmem:[%s182 + $0x60] sm:$0xff]
        %v206 = vld [vmem:[%s182 + $0x68] sm:$0xff]
        %v207 = vld [vmem:[%s182 + $0x70] sm:$0xff]
        %v208 = vld [vmem:[%s182 + $0x78] sm:$0xff]
        %v209 = vld [vmem:[%s1] sm:$0x1]
        %s210 = sld [smem:[#allocation2]]
        %v212 = vlaneseq
        %v213 = vshrl.u32 %v212, 7
        %v214 = vsub.s32 0, %v213
        %v215 = vrot.slane %v209, %v214
        %v217 = vmul.f32 %v193, %v215
        %v218 = vmul.f32 %v194, %v215
        %v219 = vmul.f32 %v195, %v215
        %v220 = vmul.f32 %v196, %v215
        %v221 = vmul.f32 %v197, %v215
        %v222 = vmul.f32 %v198, %v215
        %v223 = vmul.f32 %v199, %v215
        %v224 = vmul.f32 %v200, %v215
        %v225 = vmul.f32 %v201, %v215
        %v226 = vmul.f32 %v202, %v215
        %v227 = vmul.f32 %v203, %v215
        %v228 = vmul.f32 %v204, %v215
        %v229 = vmul.f32 %v205, %v215
        %v230 = vmul.f32 %v206, %v215
        %v231 = vmul.f32 %v207, %v215
        %v232 = vmul.f32 %v208, %v215
        %vm233 = vcmask 80896
        %v234 = vsel %vm233, %v217, 0.0
        %235 = vadd.xlane.f32.xlu0 %v234
        %v236 = vpop.xlane.xlu0 %235
        %v237 = vsel %vm233, %v218, 0.0
        %238 = vadd.xlane.f32.xlu0 %v237
        %v239 = vpop.xlane.xlu0 %238
        %v240 = vsel %vm233, %v219, 0.0
        %241 = vadd.xlane.f32.xlu0 %v240
        %v242 = vpop.xlane.xlu0 %241
        %v243 = vsel %vm233, %v220, 0.0
        %244 = vadd.xlane.f32.xlu0 %v243
        %v245 = vpop.xlane.xlu0 %244
        %v246 = vsel %vm233, %v221, 0.0
        %247 = vadd.xlane.f32.xlu0 %v246
        %v248 = vpop.xlane.xlu0 %247
        %v249 = vsel %vm233, %v222, 0.0
        %250 = vadd.xlane.f32.xlu0 %v249
        %v251 = vpop.xlane.xlu0 %250
        %v252 = vsel %vm233, %v223, 0.0
        %253 = vadd.xlane.f32.xlu0 %v252
        %v254 = vpop.xlane.xlu0 %253
        %v255 = vsel %vm233, %v224, 0.0
        %256 = vadd.xlane.f32.xlu0 %v255
        %v257 = vpop.xlane.xlu0 %256
        %v258 = vsel %vm233, %v225, 0.0
        %259 = vadd.xlane.f32.xlu0 %v258
        %v260 = vpop.xlane.xlu0 %259
        %v261 = vsel %vm233, %v226, 0.0
        %262 = vadd.xlane.f32.xlu0 %v261
        %v263 = vpop.xlane.xlu0 %262
        %v264 = vsel %vm233, %v227, 0.0
        %265 = vadd.xlane.f32.xlu0 %v264
        %v266 = vpop.xlane.xlu0 %265
        %v267 = vsel %vm233, %v228, 0.0
        %268 = vadd.xlane.f32.xlu0 %v267
        %v269 = vpop.xlane.xlu0 %268
        %v270 = vsel %vm233, %v229, 0.0
        %271 = vadd.xlane.f32.xlu0 %v270
        %v272 = vpop.xlane.xlu0 %271
        %v273 = vsel %vm233, %v230, 0.0
        %274 = vadd.xlane.f32.xlu0 %v273
        %v275 = vpop.xlane.xlu0 %274
        %v276 = vsel %vm233, %v231, 0.0
        %277 = vadd.xlane.f32.xlu0 %v276
        %v278 = vpop.xlane.xlu0 %277
        %v279 = vsel %vm233, %v232, 0.0
        %280 = vadd.xlane.f32.xlu0 %v279
        %v281 = vpop.xlane.xlu0 %280
        %v282 = vstv %s210
        %v283 = vadd.f32 %v236, %v282
        %v284 = vadd.f32 %v239, %v282
        %v285 = vadd.f32 %v242, %v282
        %v286 = vadd.f32 %v245, %v282
        %v287 = vadd.f32 %v248, %v282
        %v288 = vadd.f32 %v251, %v282
        %v289 = vadd.f32 %v254, %v282
        %v290 = vadd.f32 %v257, %v282
        %v291 = vadd.f32 %v260, %v282
        %v292 = vadd.f32 %v263, %v282
        %v293 = vadd.f32 %v266, %v282
        %v294 = vadd.f32 %v269, %v282
        %v295 = vadd.f32 %v272, %v282
        %v296 = vadd.f32 %v275, %v282
        %v297 = vadd.f32 %v278, %v282
        %v298 = vadd.f32 %v281, %v282
        %vm299 = vcmask 7168
        %300 = vst.msk [vmem:[%s173] sm:$0xff] %vm299, %v283
        %301 = vst.msk [vmem:[%s173 + $0x8] sm:$0xff] %vm299, %v284
        %302 = vst.msk [vmem:[%s173 + $0x10] sm:$0xff] %vm299, %v285
        %303 = vst.msk [vmem:[%s173 + $0x18] sm:$0xff] %vm299, %v286
        %304 = vst.msk [vmem:[%s173 + $0x20] sm:$0xff] %vm299, %v287
        %305 = vst.msk [vmem:[%s173 + $0x28] sm:$0xff] %vm299, %v288
        %306 = vst.msk [vmem:[%s173 + $0x30] sm:$0xff] %vm299, %v289
        %307 = vst.msk [vmem:[%s173 + $0x38] sm:$0xff] %vm299, %v290
        %308 = vst.msk [vmem:[%s173 + $0x40] sm:$0xff] %vm299, %v291
        %309 = vst.msk [vmem:[%s173 + $0x48] sm:$0xff] %vm299, %v292
        %310 = vst.msk [vmem:[%s173 + $0x50] sm:$0xff] %vm299, %v293
        %311 = vst.msk [vmem:[%s173 + $0x58] sm:$0xff] %vm299, %v294
        %312 = vst.msk [vmem:[%s173 + $0x60] sm:$0xff] %vm299, %v295
        %313 = vst.msk [vmem:[%s173 + $0x68] sm:$0xff] %vm299, %v296
        %314 = vst.msk [vmem:[%s173 + $0x70] sm:$0xff] %vm299, %v297
        %315 = vst.msk [vmem:[%s173 + $0x78] sm:$0xff] %vm299, %v298
        %s316 = sand.u32 %s91, 1
        %s317 = sand.u32 %s91, 1
        %s318 = smul.addr %s317, 128
        %s319 = scalar_lea.vmem [#allocation3], %s318
        // Predicated region
        $region33: #{tpu_custom_call.1} parent=31 // pred_check
          %p320 = pneg %p101
        $region34: #{tpu_custom_call.1} parent=31 // pred_check_branch
          %322 = sbr.rel (%p320) target = $region36
        $region35: #{tpu_custom_call.1} parent=31 // pred_region
          %s323 = smul.u32 16, %s15
          %s324 = ssub.s32 25, %s323
          %p325 = scmp.lt.s32.totalorder %s324, 16
          %s326 = scalar_select %p325, %s324, 16
          %s327 = smul.u32 128, %s326
          %p328 = scmp.ne.s32.totalorder 0, %s327
          %s329 = smul.addr %s323, 8
          %s330 = scalar_lea.vmem %s3, %s329
          // Predicated region
          $region37: #{tpu_custom_call.1} parent=35 // pred_check
            %p331 = pneg %p328
          $region38: #{tpu_custom_call.1} parent=35 // pred_check_branch
            %333 = sbr.rel (%p331) target = $region40
          $region39: #{tpu_custom_call.1} parent=35 // pred_region
            // Predicated region
            $region41: #{tpu_custom_call.1} parent=39 // pred_check
              _
            $region42: #{tpu_custom_call.1} parent=39 // pred_check_branch
              %335 = sbr.rel (0) target = $region44
            $region43: #{tpu_custom_call.1} parent=39 // pred_region
              // Predicated region
              $region63: #{tpu_custom_call.1} parent=43 // pred_check
                _
              $region64: #{tpu_custom_call.1} parent=43 // pred_check_branch
                %414 = sbr.rel (0) target = $region66
              $region65: #{tpu_custom_call.1} parent=43 // pred_region
                %s415 = sshrl.u32 %s326, 4
                // While loop
                $region67: #{tpu_custom_call.1} parent=65 // loop_pre_header
                  _
                $region68: #{tpu_custom_call.1} parent=65 // loop_header
                  %s417 = sphi 0, %s419
                  %p418 = scmp.ge.s32.totalorder %s417, %s415
                  %s422 = sphi 0, %s459
                  %s423 = sphi %s319, %s462
                  %s424 = sphi %s330, %s463
                $region69: #{tpu_custom_call.1} parent=65 // loop_header_branch
                  %421 = sbr.rel (%p418) target = $region73
                $region70: #{tpu_custom_call.1} parent=65 // loop_body
                  %v425 = vld [vmem:[%s423] sm:$0xff]
                  %426 = vst [vmem:[%s424] sm:$0xff] %v425
                  %v427 = vld [vmem:[%s423 + $0x8] sm:$0xff]
                  %428 = vst [vmem:[%s424 + $0x8] sm:$0xff] %v427
                  %v429 = vld [vmem:[%s423 + $0x10] sm:$0xff]
                  %430 = vst [vmem:[%s424 + $0x10] sm:$0xff] %v429
                  %v431 = vld [vmem:[%s423 + $0x18] sm:$0xff]
                  %432 = vst [vmem:[%s424 + $0x18] sm:$0xff] %v431
                  %v433 = vld [vmem:[%s423 + $0x20] sm:$0xff]
                  %434 = vst [vmem:[%s424 + $0x20] sm:$0xff] %v433
                  %v435 = vld [vmem:[%s423 + $0x28] sm:$0xff]
                  %436 = vst [vmem:[%s424 + $0x28] sm:$0xff] %v435
                  %v437 = vld [vmem:[%s423 + $0x30] sm:$0xff]
                  %438 = vst [vmem:[%s424 + $0x30] sm:$0xff] %v437
                  %v439 = vld [vmem:[%s423 + $0x38] sm:$0xff]
                  %440 = vst [vmem:[%s424 + $0x38] sm:$0xff] %v439
                  %v441 = vld [vmem:[%s423 + $0x40] sm:$0xff]
                  %442 = vst [vmem:[%s424 + $0x40] sm:$0xff] %v441
                  %v443 = vld [vmem:[%s423 + $0x48] sm:$0xff]
                  %444 = vst [vmem:[%s424 + $0x48] sm:$0xff] %v443
                  %v445 = vld [vmem:[%s423 + $0x50] sm:$0xff]
                  %446 = vst [vmem:[%s424 + $0x50] sm:$0xff] %v445
                  %v447 = vld [vmem:[%s423 + $0x58] sm:$0xff]
                  %448 = vst [vmem:[%s424 + $0x58] sm:$0xff] %v447
                  %v449 = vld [vmem:[%s423 + $0x60] sm:$0xff]
                  %450 = vst [vmem:[%s424 + $0x60] sm:$0xff] %v449
                  %v451 = vld [vmem:[%s423 + $0x68] sm:$0xff]
                  %452 = vst [vmem:[%s424 + $0x68] sm:$0xff] %v451
                  %v453 = vld [vmem:[%s423 + $0x70] sm:$0xff]
                  %454 = vst [vmem:[%s424 + $0x70] sm:$0xff] %v453
                  %v455 = vld [vmem:[%s423 + $0x78] sm:$0xff]
                  %456 = vst [vmem:[%s424 + $0x78] sm:$0xff] %v455
                  %s457 = sadd.s32 1, %s422
                  %p458 = scmp.ge.s32.totalorder %s457, %s415
                  %s459 = scalar_select %p458, 0, %s457
                  %s460 = smul.u32 %s459, 128
                  %s461 = smul.u32 %s459, 128
                  %s462 = scalar_lea.vmem %s319, %s460 [#allocation3]
                  %s463 = scalar_lea.vmem %s330, %s461
                $region71: #{tpu_custom_call.1} parent=65 // loop_footer
                  %s419 = sadd.s32 %s417, 1
                $region72: #{tpu_custom_call.1} parent=65 // loop_footer_branch
                  %416 = sbr.rel target = $region68
                $region73: #{tpu_custom_call.1} parent=65 // loop_exit
                  _
                %s464 = sshrl.u32 %s326, 4
                %s465 = sand.u32 %s326, 15
                %s466 = smul.u32 %s464, 16
                %s467 = smul.u32 8, %s466
                %s468 = scalar_lea.vmem %s319, %s467 [#allocation3]
                %s469 = smul.u32 8, %s466
                %s470 = scalar_lea.vmem %s330, %s469
                // While loop
                $region74: #{tpu_custom_call.1} parent=65 // loop_pre_header
                  _
                $region75: #{tpu_custom_call.1} parent=65 // loop_header
                  %s472 = sphi 0, %s474
                  %p473 = scmp.ge.s32.totalorder %s472, %s465
                  %s477 = sphi 0, %s484
                  %s478 = sphi %s468, %s487
                  %s479 = sphi %s470, %s488
                $region76: #{tpu_custom_call.1} parent=65 // loop_header_branch
                  %476 = sbr.rel (%p473) target = $region80
                $region77: #{tpu_custom_call.1} parent=65 // loop_body
                  %v480 = vld [vmem:[%s478] sm:$0xff]
                  %481 = vst [vmem:[%s479] sm:$0xff] %v480
                  %s482 = sadd.s32 1, %s477
                  %p483 = scmp.ge.s32.totalorder %s482, %s465
                  %s484 = scalar_select %p483, 0, %s482
                  %s485 = smul.u32 %s484, 8
                  %s486 = smul.u32 %s484, 8
                  %s487 = scalar_lea.vmem %s468, %s485 [#allocation3]
                  %s488 = scalar_lea.vmem %s470, %s486
                $region78: #{tpu_custom_call.1} parent=65 // loop_footer
                  %s474 = sadd.s32 %s472, 1
                $region79: #{tpu_custom_call.1} parent=65 // loop_footer_branch
                  %471 = sbr.rel target = $region75
                $region80: #{tpu_custom_call.1} parent=65 // loop_exit
                  _
              $region66: #{tpu_custom_call.1} parent=43 // pred_fallthru
                _
              // Predicated region
              $region81: #{tpu_custom_call.1} parent=43 // pred_check
                _
              $region82: #{tpu_custom_call.1} parent=43 // pred_check_branch
                %490 = sbr.rel target = $region84
              $region83: #{tpu_custom_call.1} parent=43 // pred_region
                _
              $region84: #{tpu_custom_call.1} parent=43 // pred_fallthru
                _
            $region44: #{tpu_custom_call.1} parent=39 // pred_fallthru
              _
            // Predicated region
            $region45: #{tpu_custom_call.1} parent=39 // pred_check
              _
            $region46: #{tpu_custom_call.1} parent=39 // pred_check_branch
              %337 = sbr.rel target = $region48
            $region47: #{tpu_custom_call.1} parent=39 // pred_region
              %s339 = sshrl.u32 %s326, 4
              // While loop
              $region49: #{tpu_custom_call.1} parent=47 // loop_pre_header
                _
              $region50: #{tpu_custom_call.1} parent=47 // loop_header
                %s341 = sphi 0, %s343
                %p342 = scmp.ge.s32.totalorder %s341, %s339
                %s346 = sphi 0, %s383
                %s347 = sphi %s319, %s386
                %s348 = sphi %s330, %s387
              $region51: #{tpu_custom_call.1} parent=47 // loop_header_branch
                %345 = sbr.rel (%p342) target = $region55
              $region52: #{tpu_custom_call.1} parent=47 // loop_body
                %v349 = vld [vmem:[%s347] sm:$0xff]
                %350 = vst [vmem:[%s348] sm:$0xff] %v349
                %v351 = vld [vmem:[%s347 + $0x8] sm:$0xff]
                %352 = vst [vmem:[%s348 + $0x8] sm:$0xff] %v351
                %v353 = vld [vmem:[%s347 + $0x10] sm:$0xff]
                %354 = vst [vmem:[%s348 + $0x10] sm:$0xff] %v353
                %v355 = vld [vmem:[%s347 + $0x18] sm:$0xff]
                %356 = vst [vmem:[%s348 + $0x18] sm:$0xff] %v355
                %v357 = vld [vmem:[%s347 + $0x20] sm:$0xff]
                %358 = vst [vmem:[%s348 + $0x20] sm:$0xff] %v357
                %v359 = vld [vmem:[%s347 + $0x28] sm:$0xff]
                %360 = vst [vmem:[%s348 + $0x28] sm:$0xff] %v359
                %v361 = vld [vmem:[%s347 + $0x30] sm:$0xff]
                %362 = vst [vmem:[%s348 + $0x30] sm:$0xff] %v361
                %v363 = vld [vmem:[%s347 + $0x38] sm:$0xff]
                %364 = vst [vmem:[%s348 + $0x38] sm:$0xff] %v363
                %v365 = vld [vmem:[%s347 + $0x40] sm:$0xff]
                %366 = vst [vmem:[%s348 + $0x40] sm:$0xff] %v365
                %v367 = vld [vmem:[%s347 + $0x48] sm:$0xff]
                %368 = vst [vmem:[%s348 + $0x48] sm:$0xff] %v367
                %v369 = vld [vmem:[%s347 + $0x50] sm:$0xff]
                %370 = vst [vmem:[%s348 + $0x50] sm:$0xff] %v369
                %v371 = vld [vmem:[%s347 + $0x58] sm:$0xff]
                %372 = vst [vmem:[%s348 + $0x58] sm:$0xff] %v371
                %v373 = vld [vmem:[%s347 + $0x60] sm:$0xff]
                %374 = vst [vmem:[%s348 + $0x60] sm:$0xff] %v373
                %v375 = vld [vmem:[%s347 + $0x68] sm:$0xff]
                %376 = vst [vmem:[%s348 + $0x68] sm:$0xff] %v375
                %v377 = vld [vmem:[%s347 + $0x70] sm:$0xff]
                %378 = vst [vmem:[%s348 + $0x70] sm:$0xff] %v377
                %v379 = vld [vmem:[%s347 + $0x78] sm:$0xff]
                %380 = vst [vmem:[%s348 + $0x78] sm:$0xff] %v379
                %s381 = sadd.s32 1, %s346
                %p382 = scmp.ge.s32.totalorder %s381, %s339
                %s383 = scalar_select %p382, 0, %s381
                %s384 = smul.u32 %s383, 128
                %s385 = smul.u32 %s383, 128
                %s386 = scalar_lea.vmem %s319, %s384 [#allocation3]
                %s387 = scalar_lea.vmem %s330, %s385
              $region53: #{tpu_custom_call.1} parent=47 // loop_footer
                %s343 = sadd.s32 %s341, 1
              $region54: #{tpu_custom_call.1} parent=47 // loop_footer_branch
                %340 = sbr.rel target = $region50
              $region55: #{tpu_custom_call.1} parent=47 // loop_exit
                _
              %s388 = sshrl.u32 %s326, 4
              %s389 = sand.u32 %s326, 15
              %s390 = smul.u32 %s388, 16
              %s391 = smul.u32 8, %s390
              %s392 = scalar_lea.vmem %s319, %s391 [#allocation3]
              %s393 = smul.u32 8, %s390
              %s394 = scalar_lea.vmem %s330, %s393
              // While loop
              $region56: #{tpu_custom_call.1} parent=47 // loop_pre_header
                _
              $region57: #{tpu_custom_call.1} parent=47 // loop_header
                %s396 = sphi 0, %s398
                %p397 = scmp.ge.s32.totalorder %s396, %s389
                %s401 = sphi 0, %s408
                %s402 = sphi %s392, %s411
                %s403 = sphi %s394, %s412
              $region58: #{tpu_custom_call.1} parent=47 // loop_header_branch
                %400 = sbr.rel (%p397) target = $region62
              $region59: #{tpu_custom_call.1} parent=47 // loop_body
                %v404 = vld [vmem:[%s402] sm:$0xff]
                %405 = vst [vmem:[%s403] sm:$0xff] %v404
                %s406 = sadd.s32 1, %s401
                %p407 = scmp.ge.s32.totalorder %s406, %s389
                %s408 = scalar_select %p407, 0, %s406
                %s409 = smul.u32 %s408, 8
                %s410 = smul.u32 %s408, 8
                %s411 = scalar_lea.vmem %s392, %s409 [#allocation3]
                %s412 = scalar_lea.vmem %s394, %s410
              $region60: #{tpu_custom_call.1} parent=47 // loop_footer
                %s398 = sadd.s32 %s396, 1
              $region61: #{tpu_custom_call.1} parent=47 // loop_footer_branch
                %395 = sbr.rel target = $region57
              $region62: #{tpu_custom_call.1} parent=47 // loop_exit
                _
            $region48: #{tpu_custom_call.1} parent=39 // pred_fallthru
              _
          $region40: #{tpu_custom_call.1} parent=35 // pred_fallthru
            _
          %491 = vnop
        $region36: #{tpu_custom_call.1} parent=31 // pred_fallthru
          _
      $region32: #{tpu_custom_call.1} parent=5 // pred_fallthru
        _
      %p492 = scmp.le.s32.totalorder 2, %s10
      // Predicated region
      $region85: #{tpu_custom_call.1} parent=5 // pred_check
        %p493 = pneg %p492
      $region86: #{tpu_custom_call.1} parent=5 // pred_check_branch
        %495 = sbr.rel (%p493) target = $region88
      $region87: #{tpu_custom_call.1} parent=5 // pred_region
        %s496 = ssub.s32 %s10, 2
        // Predicated region
        $region89: #{tpu_custom_call.1} parent=87 // pred_check
          %p497 = pneg %p107
        $region90: #{tpu_custom_call.1} parent=87 // pred_check_branch
          %499 = sbr.rel (%p497) target = $region92
        $region91: #{tpu_custom_call.1} parent=87 // pred_region
          %s500 = sand.u32 %s92, 1
          %s501 = sand.u32 %s92, 1
          %s502 = smul.addr %s501, 128
          %s503 = scalar_lea.vmem [#allocation3], %s502
        $region92: #{tpu_custom_call.1} parent=87 // pred_fallthru
          _
      $region88: #{tpu_custom_call.1} parent=5 // pred_fallthru
        _
    $region6: #{tpu_custom_call.1} parent=1 // loop_footer
      %s14 = sadd.s32 1, %s10
    $region7: #{tpu_custom_call.1} parent=1 // loop_footer_branch
      %9 = sbr.rel target = $region3
    $region8: #{tpu_custom_call.1} parent=1 // loop_exit
      _

</llo_original>
